<compile_context>
chip_gen: v7x
topology: tpu7x:2x2x1
jax: 0.10.0
libtpu: 0.0.40
codegen_flags: <defaults>
</compile_context>

<pallas_src>
import functools

import jax
import jax.numpy as jnp
from jax.experimental import pallas as pl
from jax.experimental.pallas import tpu as pltpu


def _round_up(x, m):
    return ((x + m - 1) // m) * m


def _has_multiple_tensorcores():
    """Best-effort detection of 2-TensorCore-per-chip generations (v4/v5p/v7x)."""
    try:
        kind = jax.devices()[0].device_kind.lower()
    except Exception:
        return False
    return any(tag in kind for tag in ("v4", "v5p", "7"))


def _wbce_kernel(x_ref, y_ref, w_ref, o_ref, acc_ref, *,
                 n_true, tile_n, mask_rows):
    """One (tile_n, tile_c) block of the weighted-BCE batch reduction."""
    k = pl.program_id(1)                      # N (reduction) axis, innermost
    nk = pl.num_programs(1)

    @pl.when(k == 0)
    def _():
        acc_ref[...] = jnp.zeros_like(acc_ref)

    # All math in f32 (matches PyTorch's f32 math for f32 inputs and keeps
    # bf16/f16 inputs numerically safe).
    x = x_ref[...].astype(jnp.float32)        # (tile_n, tile_c) logits
    y = y_ref[...].astype(jnp.float32)        # (tile_n, tile_c) targets

    # Numerically stable BCE-with-logits (same formulation as PyTorch):
    #   loss = max(x, 0) - x*y + log1p(exp(-|x|))
    per_elem = jnp.maximum(x, 0.0) - x * y + jnp.log1p(jnp.exp(-jnp.abs(x)))

    def _rowsum(vals):
        # Reduce (tile_n, tc) -> (acc_rows, tc) with pure vreg slab adds
        # (no cross-sublane XLU work in the hot loop).
        if tile_n <= 8:
            return vals
        part = vals[0:8, :]
        for r in range(1, tile_n // 8):
            part = part + vals[8 * r:8 * (r + 1), :]
        return part

    if mask_rows:
        # Only the last N block can contain invalid (stale) rows; keep the
        # iota/compare/select off the other grid steps entirely.
        @pl.when(k < nk - 1)
        def _():
            acc_ref[...] += _rowsum(per_elem)

        @pl.when(k == nk - 1)
        def _():
            row = jax.lax.broadcasted_iota(jnp.int32, per_elem.shape, 0)
            valid = (k * tile_n + row) < n_true
            acc_ref[...] += _rowsum(jnp.where(valid, per_elem, 0.0))
    else:
        acc_ref[...] += _rowsum(per_elem)

    @pl.when(k == nk - 1)
    def _():
        w = w_ref[...].astype(jnp.float32)    # (1, tile_c)
        col_sum = jnp.sum(acc_ref[...], axis=0, keepdims=True)   # one XLU reduce
        o_ref[...] = (col_sum * (w * (1.0 / n_true))).astype(o_ref.dtype)


def _wbce_jnp(logits, targets, class_weights, reduction):
    """Plain-JAX fallback for tiny inputs (XLA fusion beats kernel overhead)."""
    x = logits.astype(jnp.float32)
    y = targets.astype(jnp.float32)
    w = class_weights.astype(jnp.float32)
    per = jnp.maximum(x, 0.0) - x * y + jnp.log1p(jnp.exp(-jnp.abs(x)))
    cl = (per.mean(0) * w).astype(logits.dtype)
    if reduction == 'none':
        return cl
    elif reduction == 'mean':
        return cl.sum() / class_weights.astype(logits.dtype).sum()
    raise ValueError(f"unsupported reduction: {reduction}")


def weighted_bce_with_logits_loss(logits, targets, class_weights,
                                  reduction='none', *,
                                  tile_c=2048, block_bytes=2 * 2**20,
                                  use_pallas=None):
    """Pallas implementation of WeightedBCEWithLogitsLoss.forward."""
    assert logits.shape == targets.shape and logits.ndim == 2
    n, c = logits.shape
    assert class_weights.shape == (c,)

    if use_pallas is None:
        # Below ~64K elements the ~0.35us/step + launch overhead dominates.
        use_pallas = n * c >= (1 << 16)
    if not use_pallas:
        return _wbce_jnp(logits, targets, class_weights, reduction)

    itemsize = jnp.dtype(logits.dtype).itemsize
    multi_tc = _has_multiple_tensorcores()

    # ---- lane (class) tile --------------------------------------------------
    if c < 128:
        tc = c                                # full-dim block; Mosaic pads lanes
    else:
        tc_cap = (c // 128) * 128             # never larger than the array
        tc = min(_round_up(tile_c, 128), tc_cap)
        # Only on 2-TC chips: keep >= 2 parallel class blocks so the "parallel"
        # C axis shards across both TensorCores.
        if multi_tc and tc >= 256 and pl.cdiv(c, tc) < 2:
            tc = max(128, ((tc // 2 + 127) // 128) * 128)
        # TODO(synk): for C <= 128 on 2-TC chips a split-N (2, C) two-accumulator
        # scheme would engage both cores; not implemented here.

    # ---- sublane (batch) tile: aim for ~block_bytes per input block ---------
    if n < 8:
        tn = n
    else:
        tn_cap = (n // 8) * 8
        tn_want = max(8, (block_bytes // (tc * itemsize) // 8) * 8)
        tn = max(8, min(tn_want, tn_cap, 1024))

    mask_rows = (n % tn) != 0
    grid = (pl.cdiv(c, tc), pl.cdiv(n, tn))   # reduction (N) axis last
    acc_rows = 8 if tn >= 8 else tn

    # PyTorch casts class_weights to half when input is half; mirror that.
    w2 = class_weights.reshape(1, c).astype(logits.dtype)

    # ---- VMEM budget (double-buffered inputs, 8-sublane-padded small bufs,
    #      f32 elementwise-temporary headroom) --------------------------------
    tn_p = _round_up(tn, 8)
    tc_p = _round_up(tc, 128)
    est = 2 * 2 * tn_p * tc_p * itemsize      # logits + targets, 2 bufs each
    est += 2 * 2 * 8 * tc_p * itemsize        # weights + output blocks, 2 bufs
    est += 8 * tc_p * 4                       # f32 accumulator scratch
    est += 4 * tn_p * tc_p * 4                # f32 temporaries headroom
    vmem_limit = int(min(40 * 2**20, max(2 * est, 24 * 2**20)))

    kernel = functools.partial(_wbce_kernel, n_true=n, tile_n=tn,
                               mask_rows=mask_rows)

    class_losses = pl.pallas_call(
        kernel,
        out_shape=jax.ShapeDtypeStruct((1, c), logits.dtype),
        grid_spec=pltpu.PrefetchScalarGridSpec(
            num_scalar_prefetch=0,
            grid=grid,
            in_specs=[
                pl.BlockSpec((tn, tc), lambda j, k: (k, j)),   # logits
                pl.BlockSpec((tn, tc), lambda j, k: (k, j)),   # targets
                pl.BlockSpec((1, tc), lambda j, k: (0, j)),    # class weights
            ],
            out_specs=pl.BlockSpec((1, tc), lambda j, k: (0, j)),
            scratch_shapes=[pltpu.VMEM((acc_rows, tc), jnp.float32)],
        ),
        compiler_params=pltpu.CompilerParams(
            dimension_semantics=("parallel", "arbitrary"),
            vmem_limit_bytes=vmem_limit),
    )(logits, targets, w2)

    class_losses = class_losses[0]            # (C,)

    if reduction == 'none':
        return class_losses
    elif reduction == 'mean':
        # Tiny C-length reduction; plain-JAX glue (matches PyTorch formula).
        return class_losses.sum() / class_weights.astype(logits.dtype).sum()
    else:
        raise ValueError(f"unsupported reduction: {reduction}")


def _reference(logits, targets, class_weights, reduction='none'):
    x = logits.astype(jnp.float32)
    y = targets.astype(jnp.float32)
    w = class_weights.astype(jnp.float32)
    per = jnp.maximum(x, 0.0) - x * y + jnp.log1p(jnp.exp(-jnp.abs(x)))
    cl = per.mean(0) * w
    if reduction == 'none':
        return cl
    return cl.sum() / w.sum()


if __name__ == "__main__":
    key = jax.random.PRNGKey(0)
    k1, k2, k3, k4, k5, k6 = jax.random.split(key, 6)

    # ---- case 1: aligned shapes (batch=8, classes=256) ----------------------
    N, C = 8, 256
    logits = jax.random.normal(k1, (N, C), dtype=jnp.float32)
    targets = (jax.random.uniform(k2, (N, C)) > 0.5).astype(jnp.float32)
    class_weights = jax.random.uniform(k3, (C,), minval=0.5, maxval=2.0,
                                       dtype=jnp.float32)

    out_none = weighted_bce_with_logits_loss(logits, targets, class_weights,
                                             reduction='none', use_pallas=True)
    out_none = jax.block_until_ready(out_none)
    ref_none = _reference(logits, targets, class_weights, 'none')
    assert out_none.shape == (C,)
    assert jnp.allclose(out_none, ref_none, atol=1e-5, rtol=1e-5)

    out_mean = weighted_bce_with_logits_loss(logits, targets, class_weights,
                                             reduction='mean', use_pallas=True)
    out_mean = jax.block_until_ready(out_mean)
    ref_mean = _reference(logits, targets, class_weights, 'mean')
    assert jnp.allclose(out_mean, ref_mean, atol=1e-5, rtol=1e-5)

    # ---- case 2: ragged shapes (partial edge blocks in N and C, no jnp.pad) --
    N2, C2 = 10, 200
    logits2 = jax.random.normal(k4, (N2, C2), dtype=jnp.float32)
    targets2 = (jax.random.uniform(k5, (N2, C2)) > 0.5).astype(jnp.float32)
    weights2 = jax.random.uniform(k6, (C2,), minval=0.5, maxval=2.0,
                                  dtype=jnp.float32)

    out2 = weighted_bce_with_logits_loss(logits2, targets2, weights2,
                                         reduction='none', use_pallas=True)
    out2 = jax.block_until_ready(out2)
    ref2 = _reference(logits2, targets2, weights2, 'none')
    assert out2.shape == (C2,)
    assert jnp.allclose(out2, ref2, atol=1e-5, rtol=1e-5)

    print("KERNEL_OK")
</pallas_src>

<mosaic_0001>
module attributes {stable_mosaic.version = 11 : i64} {
  func.func @_wbce_kernel(%arg0: i32, %arg1: i32, %arg2: memref<8x256xf32, #tpu.memory_space<vmem>>, %arg3: memref<8x256xf32, #tpu.memory_space<vmem>>, %arg4: memref<1x256xf32, #tpu.memory_space<vmem>>, %arg5: memref<1x256xf32, #tpu.memory_space<vmem>>, %arg6: memref<8x256xf32, #tpu.memory_space<vmem>>) attributes {dimension_semantics = [#tpu.dimension_semantics<parallel>, #tpu.dimension_semantics<arbitrary>], iteration_bounds = array<i64: 1, 1>, scalar_prefetch = 0 : i64, scratch_operands = 1 : i64, tpu.core_type = #tpu.core_type<tc>, window_params = [{transform_indices = @transform_0, window_bounds = array<i64: 8, 256>}, {transform_indices = @transform_1, window_bounds = array<i64: 8, 256>}, {transform_indices = @transform_2, window_bounds = array<i64: 1, 256>}, {transform_indices = @transform_3, window_bounds = array<i64: 1, 256>}]} {
    %c0_i32 = arith.constant 0 : i32
    %0 = arith.cmpi eq, %arg1, %c0_i32 : i32
    %1 = arith.extui %0 : i1 to i32
    %c0_i32_0 = arith.constant 0 : i32
    %2 = arith.cmpi ne, %1, %c0_i32_0 : i32
    scf.if %2 {
      %cst_11 = arith.constant 0.000000e+00 : f32
      %21 = vector.broadcast %cst_11 : f32 to vector<8x256xf32>
      %c0_12 = arith.constant 0 : index
      %c0_13 = arith.constant 0 : index
      %22 = vector.load %arg6[%c0_12, %c0_13] : memref<8x256xf32, #tpu.memory_space<vmem>>, vector<8x256xf32>
      tpu.vector_store %arg6[%c0_12, %c0_13], %21 {strides = array<i32>} : memref<8x256xf32, #tpu.memory_space<vmem>>, vector<8x256xf32>,
    } else {
    }
    %c0 = arith.constant 0 : index
    %c0_1 = arith.constant 0 : index
    %3 = vector.load %arg2[%c0, %c0_1] : memref<8x256xf32, #tpu.memory_space<vmem>>, vector<8x256xf32>
    %c0_2 = arith.constant 0 : index
    %c0_3 = arith.constant 0 : index
    %4 = vector.load %arg3[%c0_2, %c0_3] : memref<8x256xf32, #tpu.memory_space<vmem>>, vector<8x256xf32>
    %cst = arith.constant 0.000000e+00 : f32
    %5 = vector.broadcast %cst : f32 to vector<8x256xf32>
    %6 = arith.maximumf %3, %5 : vector<8x256xf32>
    %7 = arith.mulf %3, %4 : vector<8x256xf32>
    %8 = arith.subf %6, %7 : vector<8x256xf32>
    %9 = math.absf %3 : vector<8x256xf32>
    %cst_4 = arith.constant 0.000000e+00 : f32
    %10 = vector.broadcast %cst_4 : f32 to vector<8x256xf32>
    %11 = arith.subf %10, %9 : vector<8x256xf32>
    %12 = math.exp %11 : vector<8x256xf32>
    %13 = math.log1p %12 : vector<8x256xf32>
    %14 = arith.addf %8, %13 : vector<8x256xf32>
    %c0_5 = arith.constant 0 : index
    %c0_6 = arith.constant 0 : index
    %15 = vector.load %arg6[%c0_5, %c0_6] : memref<8x256xf32, #tpu.memory_space<vmem>>, vector<8x256xf32>
    %16 = arith.addf %15, %14 : vector<8x256xf32>
    %c0_7 = arith.constant 0 : index
    %c0_8 = arith.constant 0 : index
    %17 = vector.load %arg6[%c0_7, %c0_8] : memref<8x256xf32, #tpu.memory_space<vmem>>, vector<8x256xf32>
    tpu.vector_store %arg6[%c0_7, %c0_8], %16 {strides = array<i32>} : memref<8x256xf32, #tpu.memory_space<vmem>>, vector<8x256xf32>,
    %c0_i32_9 = arith.constant 0 : i32
    %18 = arith.cmpi eq, %arg1, %c0_i32_9 : i32
    %19 = arith.extui %18 : i1 to i32
    %c0_i32_10 = arith.constant 0 : i32
    %20 = arith.cmpi ne, %19, %c0_i32_10 : i32
    scf.if %20 {
      %c0_11 = arith.constant 0 : index
      %c0_12 = arith.constant 0 : index
      %21 = vector.load %arg4[%c0_11, %c0_12] : memref<1x256xf32, #tpu.memory_space<vmem>>, vector<1x256xf32>
      %c0_13 = arith.constant 0 : index
      %c0_14 = arith.constant 0 : index
      %22 = vector.load %arg6[%c0_13, %c0_14] : memref<8x256xf32, #tpu.memory_space<vmem>>, vector<8x256xf32>
      %cst_15 = arith.constant dense<0.000000e+00> : vector<256xf32>
      %23 = vector.multi_reduction <add>, %22, %cst_15 [0] : vector<8x256xf32> to vector<256xf32>
      %24 = vector.shape_cast %23 : vector<256xf32> to vector<1x256xf32>
      %cst_16 = arith.constant 1.250000e-01 : f32
      %25 = vector.broadcast %cst_16 : f32 to vector<1x256xf32>
      %26 = arith.mulf %21, %25 : vector<1x256xf32>
      %27 = arith.mulf %24, %26 : vector<1x256xf32>
      %c0_17 = arith.constant 0 : index
      %c0_18 = arith.constant 0 : index
      %28 = vector.load %arg5[%c0_17, %c0_18] : memref<1x256xf32, #tpu.memory_space<vmem>>, vector<1x256xf32>
      tpu.vector_store %arg5[%c0_17, %c0_18], %27 {strides = array<i32>} : memref<1x256xf32, #tpu.memory_space<vmem>>, vector<1x256xf32>,
    } else {
    }
    return
  }
  func.func @transform_0(%arg0: i32, %arg1: i32) -> (i32, i32) {
    %c0_i32 = arith.constant 0 : i32
    return %arg1, %arg0 : i32, i32
  }
  func.func @transform_1(%arg0: i32, %arg1: i32) -> (i32, i32) {
    %c0_i32 = arith.constant 0 : i32
    return %arg1, %arg0 : i32, i32
  }
  func.func @transform_2(%arg0: i32, %arg1: i32) -> (i32, i32) {
    %c0_i32 = arith.constant 0 : i32
    %c0_i32_0 = arith.constant 0 : i32
    return %c0_i32, %arg0 : i32, i32
  }
  func.func @transform_3(%arg0: i32, %arg1: i32) -> (i32, i32) {
    %c0_i32 = arith.constant 0 : i32
    %c0_i32_0 = arith.constant 0 : i32
    return %c0_i32, %arg0 : i32, i32
  }
}

</mosaic_0001>

<llo_original>
// kernel: tpu_custom_call.1
$region0: #{tpu_custom_call.1}
  #allocation0 [shape = 'u32[]', space=smem, size = 0x4, offset = 0x4, fixed_abs, tag = 'smem constant byte address 0x4 - core index']
  #allocation1 [shape = 'u32[144,128]{1,0:T(1,128)}', space=vmem, size = 0x12000, scoped, tag = 'internal scratch']
  #allocation2 [shape = 'f32[8,256]{1,0:T(8,128)}', space=vmem, size = 0x2000, scoped, tag = 'scratch operand']
  %s0 = inlined_call_operand.hbm [shape: f32[8,256], index: 0, kind: input, shape index: {}]
  %s1 = inlined_call_operand.hbm [shape: f32[8,256], index: 1, kind: input, shape index: {}]
  %s2 = inlined_call_operand.vmem [shape: f32[1,256], index: 2, kind: input, shape index: {}]
  %s3 = inlined_call_operand.hbm [shape: f32[1,256], index: 3, kind: output, shape index: {}]
  %s4 = sld [smem:[#allocation0]]
  $region38: #{tpu_custom_call.1} parent=0
    _
  %s6 = ssub.s32 1, %s4
  %s7 = scalar_select 0, %s6, %s4
  $region1: #{tpu_custom_call.1} parent=0
    #allocation3 [shape = 'u8[8192]{0}', space=vmem, size = 0x2000, scoped, tag = 'input window, operand 0, single buffered']
    #allocation4 [shape = 's32[1]{0}', space=sflag, size = 0x4, scoped, tag = 'scoped memory for tpu_custom_call.1']
    #allocation5 [shape = 's32[1]{0}', space=sflag, size = 0x4, scoped, tag = 'scoped memory for tpu_custom_call.1']
    #allocation6 [shape = 'u8[8192]{0}', space=vmem, size = 0x2000, scoped, tag = 'input window, operand 1, single buffered']
    #allocation7 [shape = 's32[1]{0}', space=sflag, size = 0x4, scoped, tag = 'scoped memory for tpu_custom_call.1']
    #allocation8 [shape = 'u8[1024]{0}', space=vmem, size = 0x400, scoped, tag = 'output window, operand 0, single buffered']
    %8 = vsyncpa [#allocation4], 0
    %9 = vsyncpa [#allocation7], 0
    %10 = vsyncpa [#allocation5], 0
    // Predicated region
    $region2: #{tpu_custom_call.1} parent=1 // pred_check
      _
    $region3: #{tpu_custom_call.1} parent=1 // pred_check_branch
      %12 = sbr.rel (0) target = $region5
    $region4: #{tpu_custom_call.1} parent=1 // pred_region
      %s14 = ssub.s32 256, 256
      %15 = vsyncadd [#allocation4], %s14
      %s17 = sshll.u32 [#allocation3], 4
      %s18 = int_to_ptr.vmem [resolvable:$true] %s17
      %20 = dma.hbm_to_vmem [thread:$0]  %s0, 256, %s18, [#allocation4]
    $region5: #{tpu_custom_call.1} parent=1 // pred_fallthru
      _
    // Predicated region
    $region6: #{tpu_custom_call.1} parent=1 // pred_check
      _
    $region7: #{tpu_custom_call.1} parent=1 // pred_check_branch
      %22 = sbr.rel (0) target = $region9
    $region8: #{tpu_custom_call.1} parent=1 // pred_region
      %s24 = ssub.s32 256, 256
      %25 = vsyncadd [#allocation7], %s24
      %s27 = sshll.u32 [#allocation6], 4
      %s28 = int_to_ptr.vmem [resolvable:$true] %s27
      %30 = dma.hbm_to_vmem [thread:$0]  %s1, 256, %s28, [#allocation7]
    $region9: #{tpu_custom_call.1} parent=1 // pred_fallthru
      _
    // Predicated region
    $region10: #{tpu_custom_call.1} parent=1 // pred_check
      _
    $region11: #{tpu_custom_call.1} parent=1 // pred_check_branch
      %32 = sbr.rel (0) target = $region13
    $region12: #{tpu_custom_call.1} parent=1 // pred_region
      _
    $region13: #{tpu_custom_call.1} parent=1 // pred_fallthru
      _
    // Predicated region
    $region14: #{tpu_custom_call.1} parent=1 // pred_check
      _
    $region15: #{tpu_custom_call.1} parent=1 // pred_check_branch
      %34 = sbr.rel (0) target = $region17
    $region16: #{tpu_custom_call.1} parent=1 // pred_region
      %35 = dma.done [#allocation4], 256
    $region17: #{tpu_custom_call.1} parent=1 // pred_fallthru
      _
    // Predicated region
    $region18: #{tpu_custom_call.1} parent=1 // pred_check
      _
    $region19: #{tpu_custom_call.1} parent=1 // pred_check_branch
      %37 = sbr.rel (0) target = $region21
    $region20: #{tpu_custom_call.1} parent=1 // pred_region
      %38 = dma.done [#allocation7], 256
    $region21: #{tpu_custom_call.1} parent=1 // pred_fallthru
      _
    %p39 = scmp.eq.s32.totalorder 0, 0
    // Predicated region
    $region22: #{tpu_custom_call.1} parent=1 // pred_check
      %p40 = pneg %p39
    $region23: #{tpu_custom_call.1} parent=1 // pred_check_branch
      %42 = sbr.rel (%p40) target = $region25
    $region24: #{tpu_custom_call.1} parent=1 // pred_region
      %43 = vst [vmem:[#allocation2] sm:$0xff] 0.0
      %44 = vst [vmem:[#allocation2 + $0x8] sm:$0xff] 0.0
    $region25: #{tpu_custom_call.1} parent=1 // pred_fallthru
      _
    %v45 = vld [vmem:[#allocation3] sm:$0xff]
    %v46 = vld [vmem:[#allocation3 + $0x8] sm:$0xff]
    %v47 = vld [vmem:[#allocation6] sm:$0xff]
    %v48 = vld [vmem:[#allocation6 + $0x8] sm:$0xff]
    %v49 = vmax.f32 %v45, 0.0
    %v50 = vmax.f32 %v46, 0.0
    %v51 = vmul.f32 %v45, %v47
    %v52 = vmul.f32 %v46, %v48
    %v53 = vsub.f32 %v49, %v51
    %v54 = vsub.f32 %v50, %v52
    %v55 = vand.u32 2147483647, %v45
    %v56 = vand.u32 2147483647, %v46
    %v57 = vsub.f32 0.0, %v55
    %v58 = vsub.f32 0.0, %v56
    %v59 = vmul.f32 %v57, 1.442695
    %v60 = vpow.pop %v59
    %v61 = vmul.f32 %v58, 1.442695
    %v62 = vpow.pop %v61
    %v63 = vadd.f32 %v60, 1.0
    %v64 = vlog2.pop %v63
    %v65 = vmul.f32 %v64, 0.6931472
    %v66 = vmul.f32 -0.5, %v60
    %v67 = vadd.f32 %v66, 1.0
    %v68 = vmul.f32 %v67, %v60
    %v69 = vand.u32 2147483647, %v60
    %vm70 = vcmp.lt.f32.partialorder %v69, 0.0004427343
    %v71 = vsel %vm70, %v68, %v65
    %v72 = vadd.f32 %v62, 1.0
    %v73 = vlog2.pop %v72
    %v74 = vmul.f32 %v73, 0.6931472
    %v75 = vmul.f32 -0.5, %v62
    %v76 = vadd.f32 %v75, 1.0
    %v77 = vmul.f32 %v76, %v62
    %v78 = vand.u32 2147483647, %v62
    %vm79 = vcmp.lt.f32.partialorder %v78, 0.0004427343
    %v80 = vsel %vm79, %v77, %v74
    %v81 = vadd.f32 %v53, %v71
    %v82 = vadd.f32 %v54, %v80
    %v83 = vld [vmem:[#allocation2] sm:$0xff]
    %v84 = vld [vmem:[#allocation2 + $0x8] sm:$0xff]
    %v85 = vadd.f32 %v83, %v81
    %v86 = vadd.f32 %v84, %v82
    %87 = vst [vmem:[#allocation2] sm:$0xff] %v85
    %88 = vst [vmem:[#allocation2 + $0x8] sm:$0xff] %v86
    // Predicated region
    $region26: #{tpu_custom_call.1} parent=1 // pred_check
      %p89 = pneg %p39
    $region27: #{tpu_custom_call.1} parent=1 // pred_check_branch
      %91 = sbr.rel (%p89) target = $region29
    $region28: #{tpu_custom_call.1} parent=1 // pred_region
      %v92 = vld [vmem:[%s2] sm:$0x3]
      %v93 = vld [vmem:[#allocation2] sm:$0xff]
      %v94 = vld [vmem:[#allocation2 + $0x8] sm:$0xff]
      %v95 = vrot.slane %v93, 4
      %v96 = vadd.f32 %v93, %v95
      %v97 = vrot.slane %v96, 2
      %v98 = vadd.f32 %v96, %v97
      %v99 = vrot.slane %v98, 1
      %v100 = vadd.f32 %v98, %v99
      %v101 = vrot.slane %v94, 4
      %v102 = vadd.f32 %v94, %v101
      %v103 = vrot.slane %v102, 2
      %v104 = vadd.f32 %v102, %v103
      %v105 = vrot.slane %v104, 1
      %v106 = vadd.f32 %v104, %v105
      %v107 = vmul.f32 %v92, 0.125
      %v109 = vlaneseq
      %v110 = vshrl.u32 %v109, 7
      %v111 = vsub.s32 0, %v110
      %v112 = vrot.slane %v107, %v111
      %v113 = vlaneseq
      %v114 = vshrl.u32 %v113, 7
      %v115 = vsub.s32 1, %v114
      %v116 = vrot.slane %v107, %v115
      %v119 = vmul.f32 %v100, %v112
      %v120 = vmul.f32 %v106, %v116
      %v123 = vcombine.low %v119, %v120
      %v125 = vunpack.c.l.s4 1966171168
      %v126 = vunpack.c.0.s8 %v125
      %v127 = vlaneseq
      %v128 = vshrl.u32 %v127, 7
      %v129 = vsub.s32 %v126, %v128
      %v130 = vrot.slane %v123, %v129
      %v132 = vunpack.c.l.s4 1966171168
      %v133 = vunpack.c.0.s8 %v132
      %v134 = vlaneseq
      %v135 = vshrl.u32 %v134, 7
      %v136 = vsub.s32 %v133, %v135
      %v137 = vrot.slane %v130, %v136
      %v139 = vlaneseq
      %vm140 = vcmp.ge.s32.totalorder %v139, 0
      %vm141 = vcmp.lt.s32.totalorder %v139, 256
      %vm142 = vmand %vm140, %vm141
      %143 = vst.msk [vmem:[#allocation8] sm:$0x3] %vm142, %v137
    $region29: #{tpu_custom_call.1} parent=1 // pred_fallthru
      _
    // Predicated region
    $region30: #{tpu_custom_call.1} parent=1 // pred_check
      _
    $region31: #{tpu_custom_call.1} parent=1 // pred_check_branch
      %145 = sbr.rel (0) target = $region33
    $region32: #{tpu_custom_call.1} parent=1 // pred_region
      %s147 = ssub.s32 32, 32
      %148 = vsyncadd [#allocation5], %s147
      %s150 = sshll.u32 [#allocation8], 4
      %s151 = int_to_ptr.vmem [resolvable:$true] %s150
      %153 = dma.vmem_to_hbm [thread:$0]  %s151, 32, %s3, [#allocation5]
    $region33: #{tpu_custom_call.1} parent=1 // pred_fallthru
      _
    // Predicated region
    $region34: #{tpu_custom_call.1} parent=1 // pred_check
      _
    $region35: #{tpu_custom_call.1} parent=1 // pred_check_branch
      %155 = sbr.rel (0) target = $region37
    $region36: #{tpu_custom_call.1} parent=1 // pred_region
      %156 = dma.done [#allocation5], 32
    $region37: #{tpu_custom_call.1} parent=1 // pred_fallthru
      _
    %157 = vsyncpa [#allocation4], 1
    %158 = vsyncpa [#allocation7], 1
    %159 = vsyncpa [#allocation5], 1

</llo_original>
